<compile_context>
chip_gen: v5e
topology: v5e:2x2
jax: 0.10.0
libtpu: 0.0.40
codegen_flags: <defaults>
</compile_context>

<pallas_src>
import functools

import jax
import jax.numpy as jnp
from jax import lax
from jax.experimental import pallas as pl
from jax.experimental.pallas import tpu as pltpu


def _contrastive_tile_kernel(imgs_ref, caps_ref, dcol_ref, drow_ref, *out_refs,
                             margin, mh_loss, tile_n, caps_resident):
    i = pl.program_id(0)          # row-tile index   ("parallel")
    j = pl.program_id(1)          # col-tile index   (reduction axis only for the MH row-max)

    c0 = pl.multiple_of(j * tile_n, tile_n)
    if caps_resident:
        caps_tile = caps_ref[pl.ds(c0, tile_n), :]        # [tn, D] slice of VMEM-resident caps
    else:
        caps_tile = caps_ref[...]                         # [tn, D] streamed tile

    # scores[r, c] = <imgs_r, caps_c>  (A . B^T: contract dim 1 with dim 1, MXU, f32 acc)
    scores = lax.dot_general(
        imgs_ref[...], caps_tile,
        dimension_numbers=(((1,), (1,)), ((), ())),
        preferred_element_type=jnp.float32)               # [tm, tn] f32

    d_col = dcol_ref[...]                                 # [tm, 1]  diag for the rows of this tile
    d_row = drow_ref[:, pl.ds(c0, tile_n)]                # [1, tn]  diag for the cols of this tile

    def _emit(kill_diag):
        s = scores
        if kill_diag:
            # Push diagonal scores to -1e30 so BOTH hinges clamp to exactly 0
            # (torch: cost.masked_fill_(eye, 0)). Only traced/executed on diagonal tiles.
            rows = lax.broadcasted_iota(jnp.int32, s.shape, 0)
            cols = lax.broadcasted_iota(jnp.int32, s.shape, 1)
            s = jnp.where(rows == cols, -1e30, s)

        s_plus = s + margin                               # CSE'd hinge prologue
        cost_capt = jnp.maximum(s_plus - d_col, 0.0)      # hinge vs. positive image
        cost_img = jnp.maximum(s_plus - d_row, 0.0)       # hinge vs. positive caption

        if mh_loss:
            capt_ref, img_ref = out_refs

            @pl.when(j == 0)
            def _():
                capt_ref[...] = jnp.zeros_like(capt_ref)

            capt_ref[...] = jnp.maximum(
                capt_ref[...], jnp.max(cost_capt, axis=1, keepdims=True))
            img_ref[...] = jnp.max(cost_img, axis=0,
                                   keepdims=True).reshape(img_ref.shape)
        else:
            # SH: only the global sum is needed -> one lane-dense partial per tile:
            # column sums of (cost_capt + cost_img). No cross-step state at all.
            (part_ref,) = out_refs
            part_ref[...] = jnp.sum(cost_capt + cost_img, axis=0,
                                    keepdims=True).reshape(part_ref.shape)

    # tm == tn, so only tiles with i == j can contain diagonal elements: mask work runs
    # on 1/n_ct of the grid steps only (recompute-under-pl.when pattern).
    @pl.when(i == j)
    def _():
        _emit(kill_diag=True)

    @pl.when(i != j)
    def _():
        _emit(kill_diag=False)


def _vmem_bytes(B, D, t, itemsize, caps_resident, mh_loss):
    """Rough double-buffered VMEM footprint for a (t, t) tile."""
    buf = 2 * t * D * itemsize                                   # imgs row tile
    buf += 2 * (B if caps_resident else t) * D * itemsize        # caps (resident or streamed)
    buf += 2 * (t * 4) + 2 * (B * 4)                             # d_col tile + resident d_row
    buf += 2 * t * 4                                             # lane-dense column partial block
    if mh_loss:
        buf += 2 * t * 4                                         # (tm, 1) resident row-max block
    buf += 6 * t * t * 4                                         # scores / hinge f32 temporaries
    return buf


def _pick_tile(B, D, itemsize, caps_resident, mh_loss, block=None,
               budget=40 * 1024 * 1024):
    if block is not None:
        assert B % block == 0, f"batch {B} must be a multiple of block {block}"
        return block
    cands = [t for t in (512, 256, 128, 64) if B % t == 0]
    fits = [t for t in cands
            if _vmem_bytes(B, D, t, itemsize, caps_resident, mh_loss) <= budget]
    for t in fits:                      # largest fitting tile that still gives >= 2 row tiles
        if B // t >= 2:                 # (v7x: 2 TensorCores shard the "parallel" axis)
            return t
    if fits:
        return fits[0]
    if cands:
        return cands[-1]
    return B                            # small / odd batch: single full-extent tile


def contrastive_loss(imgs, caps, margin=0.2, mh_loss=False, block=None,
                     compute_dtype=jnp.bfloat16, caps_resident=None):
    """Pallas implementation of ContrastiveLoss.forward(imgs, caps) -> scalar."""
    assert imgs.ndim == 2 and imgs.shape == caps.shape
    B, D = imgs.shape

    imgs_c = imgs.astype(compute_dtype)
    caps_c = caps.astype(compute_dtype)
    itemsize = jnp.dtype(compute_dtype).itemsize

    if caps_resident is None:
        caps_resident = (B * D * itemsize) <= 4 * 1024 * 1024

    tm = tn = _pick_tile(B, D, itemsize, caps_resident, mh_loss, block)
    n_rt, n_ct = B // tm, B // tn

    # Diagonal of the score matrix from the same (quantized) operands the MXU sees,
    # accumulated in f32: cheap O(B*D) pre-pass, fed as a [B,1] column and a resident [1,B] row.
    d = jnp.sum(imgs_c.astype(jnp.float32) * caps_c.astype(jnp.float32), axis=1)
    d_col = d.reshape(B, 1)
    d_row = d.reshape(1, B)

    kernel = functools.partial(
        _contrastive_tile_kernel,
        margin=float(margin), mh_loss=bool(mh_loss), tile_n=tn,
        caps_resident=bool(caps_resident))

    caps_spec = (pl.BlockSpec((B, D), lambda i, j: (0, 0)) if caps_resident
                 else pl.BlockSpec((tn, D), lambda i, j: (j, 0)))

    in_specs = [
        pl.BlockSpec((tm, D), lambda i, j: (i, 0)),     # imgs row tile
        caps_spec,                                      # caps: fully resident or streamed tile
        pl.BlockSpec((tm, 1), lambda i, j: (i, 0)),     # diag, column form (resident per i)
        pl.BlockSpec((1, B), lambda i, j: (0, 0)),      # diag, row form (fully resident)
    ]

    vmem_limit = int(min(max(
        2 * _vmem_bytes(B, D, tm, itemsize, caps_resident, mh_loss),
        32 * 1024 * 1024), 48 * 1024 * 1024))            # <= 48 MiB: safe on v7x's 64 MiB VMEM

    if mh_loss:
        out_shape = (
            jax.ShapeDtypeStruct((B, 1), jnp.float32),         # per-row running max
            jax.ShapeDtypeStruct((n_rt, 1, B), jnp.float32),   # per-row-tile column maxes
        )
        out_specs = [
            pl.BlockSpec((tm, 1), lambda i, j: (i, 0)),        # resident across j
            pl.BlockSpec((1, 1, tn), lambda i, j: (i, 0, j)),  # lane-dense
        ]
        dim_sem = ("parallel", "arbitrary")
    else:
        out_shape = jax.ShapeDtypeStruct((n_rt, 1, B), jnp.float32)
        out_specs = pl.BlockSpec((1, 1, tn), lambda i, j: (i, 0, j))
        dim_sem = ("parallel", "parallel")               # SH has no cross-step state

    out = pl.pallas_call(
        kernel,
        out_shape=out_shape,
        grid_spec=pltpu.PrefetchScalarGridSpec(
            num_scalar_prefetch=0,
            grid=(n_rt, n_ct),
            in_specs=in_specs,
            out_specs=out_specs,
        ),
        compiler_params=pltpu.CompilerParams(
            dimension_semantics=dim_sem,
            vmem_limit_bytes=vmem_limit,
        ),
    )(imgs_c, caps_c, d_col, d_row)

    if mh_loss:
        capt_vec, img_part = out
        # per-column max over row tiles, then sum; plus sum of per-row maxes
        return jnp.sum(capt_vec) + jnp.sum(jnp.max(img_part, axis=0))
    return jnp.sum(out)


def _reference_loss(imgs, caps, margin=0.2, mh_loss=False):
    """Pure-JAX reference mirroring the PyTorch module (f32, HIGHEST precision)."""
    scores = jnp.dot(imgs, caps.T, precision=lax.Precision.HIGHEST)
    d = jnp.diag(scores)[:, None]
    cost_capt = jnp.maximum(margin + scores - d, 0.0)
    cost_img = jnp.maximum(margin + scores - d.T, 0.0)
    eye = jnp.eye(scores.shape[0], dtype=bool)
    cost_capt = jnp.where(eye, 0.0, cost_capt)
    cost_img = jnp.where(eye, 0.0, cost_img)
    if mh_loss:
        return jnp.sum(jnp.max(cost_capt, axis=1)) + jnp.sum(jnp.max(cost_img, axis=0))
    return jnp.sum(cost_capt + cost_img)


if __name__ == "__main__":
    key = jax.random.PRNGKey(0)
    k1, k2, k3, k4 = jax.random.split(key, 4)

    def _l2norm(x):
        return x / jnp.linalg.norm(x, axis=1, keepdims=True)

    margin = 0.2

    # Tiled path: B=256, D=64 -> auto tile 128 (2x2 grid: >= 2 row tiles for megacore,
    # diagonal + off-diagonal tiles exercised), resident caps, bf16 MXU inputs.
    B, D = 256, 64
    imgs = _l2norm(jax.random.normal(k1, (B, D), dtype=jnp.float32))
    caps = _l2norm(jax.random.normal(k2, (B, D), dtype=jnp.float32))

    ref_sh = _reference_loss(imgs, caps, margin=margin, mh_loss=False)
    ref_mh = _reference_loss(imgs, caps, margin=margin, mh_loss=True)

    # Default (bf16 MXU) path.
    loss_sh = contrastive_loss(imgs, caps, margin=margin, mh_loss=False)
    loss_mh = contrastive_loss(imgs, caps, margin=margin, mh_loss=True)
    jax.block_until_ready((loss_sh, loss_mh))
    assert jnp.allclose(loss_sh, ref_sh, rtol=1e-2, atol=5.0), (loss_sh, ref_sh)
    assert jnp.allclose(loss_mh, ref_mh, rtol=1e-2, atol=5.0), (loss_mh, ref_mh)

    # f32 compute + streamed-caps path (tight check, exercises the non-resident branch).
    loss_sh32 = contrastive_loss(imgs, caps, margin=margin, mh_loss=False,
                                 compute_dtype=jnp.float32, caps_resident=False, block=128)
    loss_mh32 = contrastive_loss(imgs, caps, margin=margin, mh_loss=True,
                                 compute_dtype=jnp.float32, caps_resident=False, block=128)
    jax.block_until_ready((loss_sh32, loss_mh32))
    assert jnp.allclose(loss_sh32, ref_sh, rtol=3e-4, atol=1e-2), (loss_sh32, ref_sh)
    assert jnp.allclose(loss_mh32, ref_mh, rtol=3e-4, atol=1e-2), (loss_mh32, ref_mh)

    # Fallback path: batch not a multiple of 64 -> single full-extent tile.
    B2, D2 = 24, 32
    imgs2 = _l2norm(jax.random.normal(k3, (B2, D2), dtype=jnp.float32))
    caps2 = _l2norm(jax.random.normal(k4, (B2, D2), dtype=jnp.float32))
    loss2 = contrastive_loss(imgs2, caps2, margin=margin, mh_loss=False,
                             compute_dtype=jnp.float32)
    jax.block_until_ready(loss2)
    ref2 = _reference_loss(imgs2, caps2, margin=margin, mh_loss=False)
    assert jnp.allclose(loss2, ref2, rtol=3e-4, atol=1e-3), (loss2, ref2)

    print("KERNEL_OK")
</pallas_src>

<mosaic_0001>
module attributes {stable_mosaic.version = 11 : i64} {
  func.func @_contrastive_tile_kernel(%arg0: i32, %arg1: i32, %arg2: memref<128x64xbf16, #tpu.memory_space<vmem>>, %arg3: memref<256x64xbf16, #tpu.memory_space<vmem>>, %arg4: memref<128x1xf32, #tpu.memory_space<vmem>>, %arg5: memref<1x256xf32, #tpu.memory_space<vmem>>, %arg6: memref<1x1x128xf32, #tpu.memory_space<vmem>>) attributes {dimension_semantics = [#tpu.dimension_semantics<parallel>, #tpu.dimension_semantics<parallel>], iteration_bounds = array<i64: 2, 2>, scalar_prefetch = 0 : i64, scratch_operands = 0 : i64, tpu.core_type = #tpu.core_type<tc>, window_params = [{transform_indices = @transform_0, window_bounds = array<i64: 128, 64>}, {pipeline_mode = #tpu.pipeline_mode<synchronous>, transform_indices = @transform_1, window_bounds = array<i64: 256, 64>}, {transform_indices = @transform_2, window_bounds = array<i64: 128, 1>}, {pipeline_mode = #tpu.pipeline_mode<synchronous>, transform_indices = @transform_3, window_bounds = array<i64: 1, 256>}, {transform_indices = @transform_4, window_bounds = array<i64: 1, 1, 128>}]} {
    %c128_i32 = arith.constant 128 : i32
    %0 = arith.muli %arg1, %c128_i32 : i32
    %1 = tpu.assume_multiple %0, 128 : i32
    %2 = arith.index_cast %1 : i32 to index
    %c0 = arith.constant 0 : index
    %3 = vector.load %arg3[%2, %c0] : memref<256x64xbf16, #tpu.memory_space<vmem>>, vector<128x64xbf16>
    %c0_0 = arith.constant 0 : index
    %c0_1 = arith.constant 0 : index
    %4 = vector.load %arg2[%c0_0, %c0_1] : memref<128x64xbf16, #tpu.memory_space<vmem>>, vector<128x64xbf16>
    %cst = arith.constant dense<0.000000e+00> : vector<128x128xf32>
    %5 = tpu.matmul %4, %3, %cst {dimension_numbers = #tpu.dot_dimension_numbers<[1], [1], [0], [0], [0, 0, 1, 0], [], []>} : vector<128x64xbf16>, vector<128x64xbf16>, vector<128x128xf32> -> vector<128x128xf32>
    %c0_2 = arith.constant 0 : index
    %c0_3 = arith.constant 0 : index
    %6 = vector.load %arg4[%c0_2, %c0_3] : memref<128x1xf32, #tpu.memory_space<vmem>>, vector<128x1xf32>
    %c0_4 = arith.constant 0 : index
    %7 = arith.index_cast %1 : i32 to index
    %8 = vector.load %arg5[%c0_4, %7] : memref<1x256xf32, #tpu.memory_space<vmem>>, vector<1x128xf32>
    %9 = arith.cmpi eq, %arg0, %arg1 : i32
    %10 = arith.extui %9 : i1 to i32
    %c0_i32 = arith.constant 0 : i32
    %11 = arith.cmpi ne, %10, %c0_i32 : i32
    scf.if %11 {
      %15 = tpu.iota {dimensions = array<i32: 0>} : vector<128x128xi32>
      %16 = tpu.iota {dimensions = array<i32: 1>} : vector<128x128xi32>
      %17 = arith.cmpi eq, %15, %16 : vector<128x128xi32>
      %cst_6 = arith.constant -1.000000e+30 : f32
      %18 = vector.broadcast %cst_6 : f32 to vector<128x128xf32>
      %19 = arith.select %17, %18, %5 : vector<128x128xi1>, vector<128x128xf32>
      %cst_7 = arith.constant 2.000000e-01 : f32
      %20 = vector.broadcast %cst_7 : f32 to vector<128x128xf32>
      %21 = arith.addf %19, %20 : vector<128x128xf32>
      %22 = vector.broadcast %6 : vector<128x1xf32> to vector<128x128xf32>
      %23 = arith.subf %21, %22 : vector<128x128xf32>
      %cst_8 = arith.constant 0.000000e+00 : f32
      %24 = vector.broadcast %cst_8 : f32 to vector<128x128xf32>
      %25 = arith.maximumf %23, %24 : vector<128x128xf32>
      %26 = vector.broadcast %8 : vector<1x128xf32> to vector<128x128xf32>
      %27 = arith.subf %21, %26 : vector<128x128xf32>
      %cst_9 = arith.constant 0.000000e+00 : f32
      %28 = vector.broadcast %cst_9 : f32 to vector<128x128xf32>
      %29 = arith.maximumf %27, %28 : vector<128x128xf32>
      %30 = arith.addf %25, %29 : vector<128x128xf32>
      %cst_10 = arith.constant dense<0.000000e+00> : vector<128xf32>
      %31 = vector.multi_reduction <add>, %30, %cst_10 [0] : vector<128x128xf32> to vector<128xf32>
      %32 = vector.shape_cast %31 : vector<128xf32> to vector<1x128xf32>
      %33 = vector.shape_cast %32 : vector<1x128xf32> to vector<1x1x128xf32>
      %c0_11 = arith.constant 0 : index
      %c0_12 = arith.constant 0 : index
      %c0_13 = arith.constant 0 : index
      %34 = vector.load %arg6[%c0_11, %c0_12, %c0_13] : memref<1x1x128xf32, #tpu.memory_space<vmem>>, vector<1x1x128xf32>
      tpu.vector_store %arg6[%c0_11, %c0_12, %c0_13], %33 {strides = array<i32>} : memref<1x1x128xf32, #tpu.memory_space<vmem>>, vector<1x1x128xf32>,
    } else {
    }
    %12 = arith.cmpi ne, %arg0, %arg1 : i32
    %13 = arith.extui %12 : i1 to i32
    %c0_i32_5 = arith.constant 0 : i32
    %14 = arith.cmpi ne, %13, %c0_i32_5 : i32
    scf.if %14 {
      %cst_6 = arith.constant 2.000000e-01 : f32
      %15 = vector.broadcast %cst_6 : f32 to vector<128x128xf32>
      %16 = arith.addf %5, %15 : vector<128x128xf32>
      %17 = vector.broadcast %6 : vector<128x1xf32> to vector<128x128xf32>
      %18 = arith.subf %16, %17 : vector<128x128xf32>
      %cst_7 = arith.constant 0.000000e+00 : f32
      %19 = vector.broadcast %cst_7 : f32 to vector<128x128xf32>
      %20 = arith.maximumf %18, %19 : vector<128x128xf32>
      %21 = vector.broadcast %8 : vector<1x128xf32> to vector<128x128xf32>
      %22 = arith.subf %16, %21 : vector<128x128xf32>
      %cst_8 = arith.constant 0.000000e+00 : f32
      %23 = vector.broadcast %cst_8 : f32 to vector<128x128xf32>
      %24 = arith.maximumf %22, %23 : vector<128x128xf32>
      %25 = arith.addf %20, %24 : vector<128x128xf32>
      %cst_9 = arith.constant dense<0.000000e+00> : vector<128xf32>
      %26 = vector.multi_reduction <add>, %25, %cst_9 [0] : vector<128x128xf32> to vector<128xf32>
      %27 = vector.shape_cast %26 : vector<128xf32> to vector<1x128xf32>
      %28 = vector.shape_cast %27 : vector<1x128xf32> to vector<1x1x128xf32>
      %c0_10 = arith.constant 0 : index
      %c0_11 = arith.constant 0 : index
      %c0_12 = arith.constant 0 : index
      %29 = vector.load %arg6[%c0_10, %c0_11, %c0_12] : memref<1x1x128xf32, #tpu.memory_space<vmem>>, vector<1x1x128xf32>
      tpu.vector_store %arg6[%c0_10, %c0_11, %c0_12], %28 {strides = array<i32>} : memref<1x1x128xf32, #tpu.memory_space<vmem>>, vector<1x1x128xf32>,
    } else {
    }
    return
  }
  func.func @transform_0(%arg0: i32, %arg1: i32) -> (i32, i32) {
    %c0_i32 = arith.constant 0 : i32
    %c0_i32_0 = arith.constant 0 : i32
    return %arg0, %c0_i32 : i32, i32
  }
  func.func @transform_1(%arg0: i32, %arg1: i32) -> (i32, i32) {
    %c0_i32 = arith.constant 0 : i32
    %c0_i32_0 = arith.constant 0 : i32
    %c0_i32_1 = arith.constant 0 : i32
    return %c0_i32, %c0_i32_0 : i32, i32
  }
  func.func @transform_2(%arg0: i32, %arg1: i32) -> (i32, i32) {
    %c0_i32 = arith.constant 0 : i32
    %c0_i32_0 = arith.constant 0 : i32
    return %arg0, %c0_i32 : i32, i32
  }
  func.func @transform_3(%arg0: i32, %arg1: i32) -> (i32, i32) {
    %c0_i32 = arith.constant 0 : i32
    %c0_i32_0 = arith.constant 0 : i32
    %c0_i32_1 = arith.constant 0 : i32
    return %c0_i32, %c0_i32_0 : i32, i32
  }
  func.func @transform_4(%arg0: i32, %arg1: i32) -> (i32, i32, i32) {
    %c0_i32 = arith.constant 0 : i32
    %c0_i32_0 = arith.constant 0 : i32
    return %arg0, %c0_i32, %arg1 : i32, i32, i32
  }
}

</mosaic_0001>

<llo_original>
// kernel: tpu_custom_call.1
$region0: #{tpu_custom_call.1}
  #allocation0 [shape = 'u32[]', space=smem, size = 0x4, offset = 0x4, fixed_abs, tag = 'smem constant byte address 0x4 - core index']
  #allocation1 [shape = 'u32[72,128]{1,0:T(1,128)}', space=vmem, size = 0x9000, scoped, tag = 'internal scratch']
  %s0 = inlined_call_operand.vmem [shape: bf16[256,64], index: 0, kind: input, shape index: {}]
  %s1 = inlined_call_operand.vmem [shape: bf16[256,64], index: 1, kind: input, shape index: {}]
  %s2 = inlined_call_operand.vmem [shape: f32[256,1], index: 2, kind: input, shape index: {}]
  %s3 = inlined_call_operand.vmem [shape: f32[1,256], index: 3, kind: input, shape index: {}]
  %s4 = inlined_call_operand.hbm [shape: f32[2,1,256], index: 4, kind: output, shape index: {}]
  %s5 = sld [smem:[#allocation0]]
  $region57: #{tpu_custom_call.1} parent=0
    _
  %s7 = ssub.s32 1, %s5
  %s8 = scalar_select 0, %s7, %s5
  $region1: #{tpu_custom_call.1} parent=0
    #allocation2 [shape = 'u8[1024]{0}', space=vmem, size = 0x400, scoped, tag = 'output window, operand 0']
    #allocation3 [shape = 's32[2]{0}', space=sflag, size = 0x8, scoped, tag = 'scoped memory for tpu_custom_call.1']
    %9 = vsyncpa [#allocation3], 0
    %s10 = scalar_lea.sflag [#allocation3], 1
    %11 = vsyncpa %s10, 0
    loop: start=0, step=1, limit=6
    $region2: #{tpu_custom_call.1} parent=1 // loop_pre_header
      _
    $region3: #{tpu_custom_call.1} parent=1 // loop_header
      %s13 = sphi 0, %s17
      %p14 = scmp.ge.s32.totalorder %s13, 6
      %s20 = sphi 0, %s32
      %s21 = sphi 0, %s28
      %s22 = sphi 0, %s20
      %s23 = sphi 0, %s21
      %s24 = sphi 0, %s22
      %s25 = sphi 0, %s23
      %s35 = sphi 0, %s37
      %s38 = sphi 0, %s35
      %s39 = sphi 0, %s38
      %s55 = sphi 0, %s39
      %s59 = sphi 0, %s59
      %s61 = sphi 0, %s59
      %s62 = sphi 0, %s61
      %s76 = sphi 0, %s62
      %s82 = sphi 0, %s84
      %s85 = sphi 0, %s82
      %s86 = sphi 0, %s85
      %s102 = sphi 0, %s86
      %s106 = sphi 0, %s106
      %s108 = sphi 0, %s106
      %s109 = sphi 0, %s108
      %s123 = sphi 0, %s109
      %s131 = sphi 0, %s133
      %s134 = sphi 0, %s131
      %s135 = sphi 0, %s134
      %s151 = sphi 0, %s135
    $region4: #{tpu_custom_call.1} parent=1 // loop_header_branch
      %16 = sbr.rel (%p14) target = $region8
    $region5: #{tpu_custom_call.1} parent=1 // loop_body
      %s18 = ssub.s32 %s13, 1
      %s19 = ssub.s32 %s13, 2
      %s26 = sadd.s32 1, %s21
      %p27 = scmp.ge.s32.totalorder %s26, 2
      %s28 = scalar_select %p27, 0, %s26
      %s29 = sadd.s32 1, %s20
      %s30 = scalar_select %p27, %s29, %s20
      %p31 = scmp.ge.s32.totalorder %s30, 2
      %s32 = scalar_select %p31, 0, %s30
      %s33 = ssub.s32 %s20, %s32
      %p34 = scmp.eq.s32.totalorder %s33, 0
      %s36 = sadd.s32 %s35, 1
      %s37 = scalar_select %p34, %s35, %s36
      %p40 = pneg %p34
      %p41 = scmp.eq.s32.totalorder %s13, 3
      %p42 = por %p40, %p41
      %p43 = scmp.ne.s32.totalorder %s35, %s38
      %p44 = scmp.eq.s32.totalorder %s13, 0
      %p45 = por %p43, %p44
      %p46 = scmp.ne.s32.totalorder %s35, %s38
      %p47 = scmp.eq.s32.totalorder %s18, 3
      %p48 = por %p46, %p47
      %p49 = scmp.ne.s32.totalorder %s38, %s39
      %p50 = scmp.eq.s32.totalorder %s18, 0
      %p51 = por %p49, %p50
      %p52 = scmp.ne.s32.totalorder %s38, %s39
      %p53 = scmp.eq.s32.totalorder %s19, 3
      %p54 = por %p52, %p53
      %p56 = scmp.ne.s32.totalorder %s39, %s55
      %p57 = scmp.eq.s32.totalorder %s19, 0
      %p58 = por %p56, %p57
      %s60 = sadd.s32 %s59, 1
      %p63 = scmp.eq.s32.totalorder %s13, 3
      %p64 = scmp.ne.s32.totalorder %s59, %s61
      %p65 = scmp.eq.s32.totalorder %s13, 0
      %p66 = por %p64, %p65
      %p67 = scmp.ne.s32.totalorder %s59, %s61
      %p68 = scmp.eq.s32.totalorder %s18, 3
      %p69 = por %p67, %p68
      %p70 = scmp.ne.s32.totalorder %s61, %s62
      %p71 = scmp.eq.s32.totalorder %s18, 0
      %p72 = por %p70, %p71
      %p73 = scmp.ne.s32.totalorder %s61, %s62
      %p74 = scmp.eq.s32.totalorder %s19, 3
      %p75 = por %p73, %p74
      %p77 = scmp.ne.s32.totalorder %s62, %s76
      %p78 = scmp.eq.s32.totalorder %s19, 0
      %p79 = por %p77, %p78
      %s80 = ssub.s32 %s20, %s32
      %p81 = scmp.eq.s32.totalorder %s80, 0
      %s83 = sadd.s32 %s82, 1
      %s84 = scalar_select %p81, %s82, %s83
      %p87 = pneg %p81
      %p88 = scmp.eq.s32.totalorder %s13, 3
      %p89 = por %p87, %p88
      %p90 = scmp.ne.s32.totalorder %s82, %s85
      %p91 = scmp.eq.s32.totalorder %s13, 0
      %p92 = por %p90, %p91
      %p93 = scmp.ne.s32.totalorder %s82, %s85
      %p94 = scmp.eq.s32.totalorder %s18, 3
      %p95 = por %p93, %p94
      %p96 = scmp.ne.s32.totalorder %s85, %s86
      %p97 = scmp.eq.s32.totalorder %s18, 0
      %p98 = por %p96, %p97
      %p99 = scmp.ne.s32.totalorder %s85, %s86
      %p100 = scmp.eq.s32.totalorder %s19, 3
      %p101 = por %p99, %p100
      %p103 = scmp.ne.s32.totalorder %s86, %s102
      %p104 = scmp.eq.s32.totalorder %s19, 0
      %p105 = por %p103, %p104
      %s107 = sadd.s32 %s106, 1
      %p110 = scmp.eq.s32.totalorder %s13, 3
      %p111 = scmp.ne.s32.totalorder %s106, %s108
      %p112 = scmp.eq.s32.totalorder %s13, 0
      %p113 = por %p111, %p112
      %p114 = scmp.ne.s32.totalorder %s106, %s108
      %p115 = scmp.eq.s32.totalorder %s18, 3
      %p116 = por %p114, %p115
      %p117 = scmp.ne.s32.totalorder %s108, %s109
      %p118 = scmp.eq.s32.totalorder %s18, 0
      %p119 = por %p117, %p118
      %p120 = scmp.ne.s32.totalorder %s108, %s109
      %p121 = scmp.eq.s32.totalorder %s19, 3
      %p122 = por %p120, %p121
      %p124 = scmp.ne.s32.totalorder %s109, %s123
      %p125 = scmp.eq.s32.totalorder %s19, 0
      %p126 = por %p124, %p125
      %s127 = ssub.s32 %s20, %s32
      %s128 = ssub.s32 %s21, %s28
      %s129 = sor.u32 %s127, %s128
      %p130 = scmp.eq.s32.totalorder %s129, 0
      %s132 = sadd.s32 %s131, 1
      %s133 = scalar_select %p130, %s131, %s132
      %p136 = pneg %p130
      %p137 = scmp.eq.s32.totalorder %s13, 3
      %p138 = por %p136, %p137
      %p139 = scmp.ne.s32.totalorder %s131, %s134
      %p140 = scmp.eq.s32.totalorder %s13, 0
      %p141 = por %p139, %p140
      %p142 = scmp.ne.s32.totalorder %s131, %s134
      %p143 = scmp.eq.s32.totalorder %s18, 3
      %p144 = por %p142, %p143
      %p145 = scmp.ne.s32.totalorder %s134, %s135
      %p146 = scmp.eq.s32.totalorder %s18, 0
      %p147 = por %p145, %p146
      %p148 = scmp.ne.s32.totalorder %s134, %s135
      %p149 = scmp.eq.s32.totalorder %s19, 3
      %p150 = por %p148, %p149
      %p152 = scmp.ne.s32.totalorder %s135, %s151
      %p153 = scmp.eq.s32.totalorder %s19, 0
      %p154 = por %p152, %p153
      %p155 = scmp.le.s32.totalorder 1, %s13
      %p156 = scmp.lt.s32.totalorder %s13, 5
      %p157 = pnand %p155, %p156
      %p158 = pneg %p157
      // Predicated region
      $region9: #{tpu_custom_call.1} parent=5 // pred_check
        _
      $region10: #{tpu_custom_call.1} parent=5 // pred_check_branch
        %160 = sbr.rel (%p157) target = $region12
      $region11: #{tpu_custom_call.1} parent=5 // pred_region
        %s161 = ssub.s32 %s13, 1
        // Predicated region
        $region13: #{tpu_custom_call.1} parent=11 // pred_check
          %p162 = pneg %p72
        $region14: #{tpu_custom_call.1} parent=11 // pred_check_branch
          %164 = sbr.rel (%p162) target = $region16
        $region15: #{tpu_custom_call.1} parent=11 // pred_region
          _
        $region16: #{tpu_custom_call.1} parent=11 // pred_fallthru
          _
        // Predicated region
        $region17: #{tpu_custom_call.1} parent=11 // pred_check
          %p165 = pneg %p119
        $region18: #{tpu_custom_call.1} parent=11 // pred_check_branch
          %167 = sbr.rel (%p165) target = $region20
        $region19: #{tpu_custom_call.1} parent=11 // pred_region
          _
        $region20: #{tpu_custom_call.1} parent=11 // pred_fallthru
          _
      $region12: #{tpu_custom_call.1} parent=5 // pred_fallthru
        _
      %p168 = scmp.lt.s32.totalorder %s13, 4
      // Predicated region
      $region21: #{tpu_custom_call.1} parent=5 // pred_check
        %p169 = pneg %p168
      $region22: #{tpu_custom_call.1} parent=5 // pred_check_branch
        %171 = sbr.rel (%p169) target = $region24
      $region23: #{tpu_custom_call.1} parent=5 // pred_region
        // Predicated region
        $region25: #{tpu_custom_call.1} parent=23 // pred_check
          %p172 = pneg %p45
        $region26: #{tpu_custom_call.1} parent=23 // pred_check_branch
          %174 = sbr.rel (%p172) target = $region28
        $region27: #{tpu_custom_call.1} parent=23 // pred_region
          %s175 = smul.u32 16, %s20
          %p176 = scmp.lt.s32.totalorder %s175, 31
          %s177 = scalar_select %p176, %s175, 31
          %s178 = smul.addr %s177, 4
          %s179 = scalar_lea.vmem %s0, %s178
          %s180 = smul.u32 16, %s20
        $region28: #{tpu_custom_call.1} parent=23 // pred_fallthru
          _
        // Predicated region
        $region29: #{tpu_custom_call.1} parent=23 // pred_check
          %p181 = pneg %p92
        $region30: #{tpu_custom_call.1} parent=23 // pred_check_branch
          %183 = sbr.rel (%p181) target = $region32
        $region31: #{tpu_custom_call.1} parent=23 // pred_region
          %s184 = smul.u32 16, %s20
          %p185 = scmp.lt.s32.totalorder %s184, 31
          %s186 = scalar_select %p185, %s184, 31
          %s187 = smul.addr %s186, 8
          %s188 = scalar_lea.vmem %s2, %s187
          %s189 = smul.u32 16, %s20
        $region32: #{tpu_custom_call.1} parent=23 // pred_fallthru
          _
      $region24: #{tpu_custom_call.1} parent=5 // pred_fallthru
        _
      %p190 = scmp.le.s32.totalorder 1, %s13
      %p191 = scmp.lt.s32.totalorder %s13, 5
      %p192 = pnand %p190, %p191
      %p193 = pneg %p192
      // Predicated region
      $region33: #{tpu_custom_call.1} parent=5 // pred_check
        _
      $region34: #{tpu_custom_call.1} parent=5 // pred_check_branch
        %195 = sbr.rel (%p192) target = $region36
      $region35: #{tpu_custom_call.1} parent=5 // pred_region
        %s196 = ssub.s32 %s13, 1
        %s197 = smul.u32 16, %s22
        %p198 = scmp.lt.s32.totalorder %s197, 31
        %s199 = scalar_select %p198, %s197, 31
        %s200 = smul.addr %s199, 4
        %s201 = scalar_lea.vmem %s0, %s200
        %p202 = pneg %p51
        %p203 = pneg %p48
        %p204 = pneg %p72
        %p205 = pneg %p69
        %s206 = smul.u32 16, %s22
        %p207 = scmp.lt.s32.totalorder %s206, 31
        %s208 = scalar_select %p207, %s206, 31
        %s209 = smul.addr %s208, 8
        %s210 = scalar_lea.vmem %s2, %s209
        %p211 = pneg %p98
        %p212 = pneg %p95
        %p213 = pneg %p119
        %p214 = pneg %p116
        %p215 = pneg %p147
        %p216 = pneg %p144
        %s217 = sand.u32 %s134, 1
        %s218 = scalar_lea.sflag [#allocation3], %s217
        %s219 = sand.u32 %s134, 1
        %s220 = scalar_lea.vmem [#allocation2], %s219
        %s221 = smul.u32 16, %s22
        %p222 = scmp.lt.s32.totalorder %s221, 31
        %s223 = scalar_select %p222, %s221, 31
        %s224 = smul.addr %s223, 4
        %s225 = scalar_lea.vmem %s0, %s224
        %s226 = smul.u32 16, %s22
        %s227 = smul.u32 16, %s22
        %p228 = scmp.lt.s32.totalorder %s227, 31
        %s229 = scalar_select %p228, %s227, 31
        %s230 = smul.addr %s229, 8
        %s231 = scalar_lea.vmem %s2, %s230
        %s232 = smul.u32 16, %s22
        %s233 = smul.u32 %s23, 128
        %s234 = sshra.s32 %s233, 3
        %s235 = sand.u32 %s233, 7
        %s236 = smul.addr %s234, 4
        %s237 = scalar_lea.vmem %s1, %s236
        %v238 = vld [vmem:[%s237] sm:$0xf]
        %v239 = vld [vmem:[%s237 + $0x4] sm:$0xf]
        %v240 = vld [vmem:[%s237 + $0x8] sm:$0xf]
        %v241 = vld [vmem:[%s237 + $0xc] sm:$0xf]
        %v242 = vld [vmem:[%s237 + $0x10] sm:$0xf]
        %v243 = vld [vmem:[%s237 + $0x14] sm:$0xf]
        %v244 = vld [vmem:[%s237 + $0x18] sm:$0xf]
        %v245 = vld [vmem:[%s237 + $0x1c] sm:$0xf]
        %v246 = vld [vmem:[%s237 + $0x20] sm:$0xf]
        %v247 = vld [vmem:[%s237 + $0x24] sm:$0xf]
        %v248 = vld [vmem:[%s237 + $0x28] sm:$0xf]
        %v249 = vld [vmem:[%s237 + $0x2c] sm:$0xf]
        %v250 = vld [vmem:[%s237 + $0x30] sm:$0xf]
        %v251 = vld [vmem:[%s237 + $0x34] sm:$0xf]
        %v252 = vld [vmem:[%s237 + $0x38] sm:$0xf]
        %v253 = vld [vmem:[%s237 + $0x3c] sm:$0xf]
        %v254 = vld [vmem:[%s225] sm:$0xf]
        %v255 = vld [vmem:[%s225 + $0x4] sm:$0xf]
        %v256 = vld [vmem:[%s225 + $0x8] sm:$0xf]
        %v257 = vld [vmem:[%s225 + $0xc] sm:$0xf]
        %v258 = vld [vmem:[%s225 + $0x10] sm:$0xf]
        %v259 = vld [vmem:[%s225 + $0x14] sm:$0xf]
        %v260 = vld [vmem:[%s225 + $0x18] sm:$0xf]
        %v261 = vld [vmem:[%s225 + $0x1c] sm:$0xf]
        %v262 = vld [vmem:[%s225 + $0x20] sm:$0xf]
        %v263 = vld [vmem:[%s225 + $0x24] sm:$0xf]
        %v264 = vld [vmem:[%s225 + $0x28] sm:$0xf]
        %v265 = vld [vmem:[%s225 + $0x2c] sm:$0xf]
        %v266 = vld [vmem:[%s225 + $0x30] sm:$0xf]
        %v267 = vld [vmem:[%s225 + $0x34] sm:$0xf]
        %v268 = vld [vmem:[%s225 + $0x38] sm:$0xf]
        %v269 = vld [vmem:[%s225 + $0x3c] sm:$0xf]
        %v286 = vunpack.c.l.b16 %v254
        %v287 = vunpack.c.l.b16 %v255
        %v288 = vunpack.c.l.b16 %v256
        %v289 = vunpack.c.l.b16 %v257
        %v290 = vunpack.c.l.b16 %v258
        %v291 = vunpack.c.l.b16 %v259
        %v292 = vunpack.c.l.b16 %v260
        %v293 = vunpack.c.l.b16 %v261
        %v294 = vunpack.c.l.b16 %v262
        %v295 = vunpack.c.l.b16 %v263
        %v296 = vunpack.c.l.b16 %v264
        %v297 = vunpack.c.l.b16 %v265
        %v298 = vunpack.c.l.b16 %v266
        %v299 = vunpack.c.l.b16 %v267
        %v300 = vunpack.c.l.b16 %v268
        %v301 = vunpack.c.l.b16 %v269
        %v302 = vpack.c.b16 %v287, %v286
        %v303 = vpack.c.b16 %v289, %v288
        %v304 = vpack.c.b16 %v291, %v290
        %v305 = vpack.c.b16 %v293, %v292
        %v306 = vpack.c.b16 %v295, %v294
        %v307 = vpack.c.b16 %v297, %v296
        %v308 = vpack.c.b16 %v299, %v298
        %v309 = vpack.c.b16 %v301, %v300
        %v326 = vunpack.c.l.b16 %v238
        %v327 = vunpack.c.l.b16 %v239
        %v328 = vunpack.c.l.b16 %v240
        %v329 = vunpack.c.l.b16 %v241
        %v330 = vunpack.c.l.b16 %v242
        %v331 = vunpack.c.l.b16 %v243
        %v332 = vunpack.c.l.b16 %v244
        %v333 = vunpack.c.l.b16 %v245
        %v334 = vunpack.c.l.b16 %v246
        %v335 = vunpack.c.l.b16 %v247
        %v336 = vunpack.c.l.b16 %v248
        %v337 = vunpack.c.l.b16 %v249
        %v338 = vunpack.c.l.b16 %v250
        %v339 = vunpack.c.l.b16 %v251
        %v340 = vunpack.c.l.b16 %v252
        %v341 = vunpack.c.l.b16 %v253
        %v342 = vpack.c.b16 %v327, %v326
        %v343 = vpack.c.b16 %v329, %v328
        %v344 = vpack.c.b16 %v331, %v330
        %v345 = vpack.c.b16 %v333, %v332
        %v346 = vpack.c.b16 %v335, %v334
        %v347 = vpack.c.b16 %v337, %v336
        %v348 = vpack.c.b16 %v339, %v338
        %v349 = vpack.c.b16 %v341, %v340
        %vm350 = vcmask 523264
        %v352 = vsel %vm350, %v302, 0
        %v355 = vsel %vm350, %v303, 0
        %v358 = vsel %vm350, %v304, 0
        %v361 = vsel %vm350, %v305, 0
        %v364 = vsel %vm350, %v306, 0
        %v367 = vsel %vm350, %v307, 0
        %v370 = vsel %vm350, %v308, 0
        %v373 = vsel %vm350, %v309, 0
        %v376 = vsel %vm350, %v342, 0
        %v379 = vsel %vm350, %v343, 0
        %v382 = vsel %vm350, %v344, 0
        %v385 = vsel %vm350, %v345, 0
        %v388 = vsel %vm350, %v346, 0
        %v391 = vsel %vm350, %v347, 0
        %v394 = vsel %vm350, %v348, 0
        %v397 = vsel %vm350, %v349, 0
        %399 = vmatpush.bf16.xpose.msra.mxu0 %v397
        %400 = vmatpush.bf16.xpose.msra.mxu0 %v394
        %401 = vmatpush.bf16.xpose.msra.mxu0 %v391
        %402 = vmatpush.bf16.xpose.msra.mxu0 %v388
        %403 = vmatpush.bf16.xpose.msra.mxu0 %v385
        %404 = vmatpush.bf16.xpose.msra.mxu0 %v382
        %405 = vmatpush.bf16.xpose.msra.mxu0 %v379
        %406 = vmatpush.bf16.xpose.msra.mxu0 %v376
        %407 = vmatmul.bf16.gmra.mxu0 %v352
        %v408 = vpop.f32.mrf.mxu0
        %v409 = vadd.f32 0.0, %v408
        %v410 = vpop.f32.mrf.mxu0
        %v411 = vadd.f32 0.0, %v410
        %412 = vmatmul.bf16.gmra.mxu0 %v355
        %v413 = vpop.f32.mrf.mxu0
        %v414 = vadd.f32 0.0, %v413
        %v415 = vpop.f32.mrf.mxu0
        %v416 = vadd.f32 0.0, %v415
        %417 = vmatmul.bf16.gmra.mxu0 %v358
        %v418 = vpop.f32.mrf.mxu0
        %v419 = vadd.f32 0.0, %v418
        %v420 = vpop.f32.mrf.mxu0
        %v421 = vadd.f32 0.0, %v420
        %422 = vmatmul.bf16.gmra.mxu0 %v361
        %v423 = vpop.f32.mrf.mxu0
        %v424 = vadd.f32 0.0, %v423
        %v425 = vpop.f32.mrf.mxu0
        %v426 = vadd.f32 0.0, %v425
        %427 = vmatmul.bf16.gmra.mxu0 %v364
        %v428 = vpop.f32.mrf.mxu0
        %v429 = vadd.f32 0.0, %v428
        %v430 = vpop.f32.mrf.mxu0
        %v431 = vadd.f32 0.0, %v430
        %432 = vmatmul.bf16.gmra.mxu0 %v367
        %v433 = vpop.f32.mrf.mxu0
        %v434 = vadd.f32 0.0, %v433
        %v435 = vpop.f32.mrf.mxu0
        %v436 = vadd.f32 0.0, %v435
        %437 = vmatmul.bf16.gmra.mxu0 %v370
        %v438 = vpop.f32.mrf.mxu0
        %v439 = vadd.f32 0.0, %v438
        %v440 = vpop.f32.mrf.mxu0
        %v441 = vadd.f32 0.0, %v440
        %442 = vmatmul.bf16.gmra.mxu0 %v373
        %v443 = vpop.f32.mrf.mxu0
        %v444 = vadd.f32 0.0, %v443
        %v445 = vpop.f32.mrf.mxu0
        %v446 = vadd.f32 0.0, %v445
        %447 = vdwg.mxu0
        %v448 = vld [vmem:[%s231] sm:$0xff]
        %v449 = vld [vmem:[%s231 + $0x8] sm:$0xff]
        %v450 = vld [vmem:[%s231 + $0x10] sm:$0xff]
        %v451 = vld [vmem:[%s231 + $0x18] sm:$0xff]
        %v452 = vld [vmem:[%s231 + $0x20] sm:$0xff]
        %v453 = vld [vmem:[%s231 + $0x28] sm:$0xff]
        %v454 = vld [vmem:[%s231 + $0x30] sm:$0xff]
        %v455 = vld [vmem:[%s231 + $0x38] sm:$0xff]
        %v456 = vld [vmem:[%s231 + $0x40] sm:$0xff]
        %v457 = vld [vmem:[%s231 + $0x48] sm:$0xff]
        %v458 = vld [vmem:[%s231 + $0x50] sm:$0xff]
        %v459 = vld [vmem:[%s231 + $0x58] sm:$0xff]
        %v460 = vld [vmem:[%s231 + $0x60] sm:$0xff]
        %v461 = vld [vmem:[%s231 + $0x68] sm:$0xff]
        %v462 = vld [vmem:[%s231 + $0x70] sm:$0xff]
        %v463 = vld [vmem:[%s231 + $0x78] sm:$0xff]
        %s464 = sshra.s32 %s233, 7
        %s465 = sand.u32 %s233, 127
        %s466 = scalar_lea.vmem %s3, %s464
        %v467 = vld [vmem:[%s466] sm:$0x1]
        %p468 = scmp.eq.s32.totalorder %s22, %s23
        // Predicated region
        $region37: #{tpu_custom_call.1} parent=35 // pred_check
          %p469 = pneg %p468
        $region38: #{tpu_custom_call.1} parent=35 // pred_check_branch
          %471 = sbr.rel (%p469) target = $region40
        $region39: #{tpu_custom_call.1} parent=35 // pred_region
          %v472 = vlaneseq
          %v473 = vshrl.u32 %v472, 7
          %v474 = vadd.s32 %v473, 8
          %v475 = vadd.s32 %v473, 16
          %v476 = vadd.s32 %v473, 24
          %v477 = vadd.s32 %v473, 32
          %v478 = vadd.s32 %v473, 40
          %v479 = vadd.s32 %v473, 48
          %v480 = vadd.s32 %v473, 56
          %v481 = vadd.s32 %v473, 64
          %v482 = vadd.s32 %v473, 72
          %v483 = vadd.s32 %v473, 80
          %v484 = vadd.s32 %v473, 88
          %v485 = vadd.s32 %v473, 96
          %v486 = vadd.s32 %v473, 104
          %v487 = vadd.s32 %v473, 112
          %v488 = vadd.s32 %v473, 120
          %v489 = vlaneseq
          %v490 = vand.u32 %v489, 127
          %vm491 = vcmp.eq.s32.totalorder %v473, %v490
          %vm492 = vcmp.eq.s32.totalorder %v474, %v490
          %vm493 = vcmp.eq.s32.totalorder %v475, %v490
          %vm494 = vcmp.eq.s32.totalorder %v476, %v490
          %vm495 = vcmp.eq.s32.totalorder %v477, %v490
          %vm496 = vcmp.eq.s32.totalorder %v478, %v490
          %vm497 = vcmp.eq.s32.totalorder %v479, %v490
          %vm498 = vcmp.eq.s32.totalorder %v480, %v490
          %vm499 = vcmp.eq.s32.totalorder %v481, %v490
          %vm500 = vcmp.eq.s32.totalorder %v482, %v490
          %vm501 = vcmp.eq.s32.totalorder %v483, %v490
          %vm502 = vcmp.eq.s32.totalorder %v484, %v490
          %vm503 = vcmp.eq.s32.totalorder %v485, %v490
          %vm504 = vcmp.eq.s32.totalorder %v486, %v490
          %vm505 = vcmp.eq.s32.totalorder %v487, %v490
          %vm506 = vcmp.eq.s32.totalorder %v488, %v490
          %v507 = vsel %vm491, -1e+30, %v409
          %v508 = vsel %vm492, -1e+30, %v411
          %v509 = vsel %vm493, -1e+30, %v414
          %v510 = vsel %vm494, -1e+30, %v416
          %v511 = vsel %vm495, -1e+30, %v419
          %v512 = vsel %vm496, -1e+30, %v421
          %v513 = vsel %vm497, -1e+30, %v424
          %v514 = vsel %vm498, -1e+30, %v426
          %v515 = vsel %vm499, -1e+30, %v429
          %v516 = vsel %vm500, -1e+30, %v431
          %v517 = vsel %vm501, -1e+30, %v434
          %v518 = vsel %vm502, -1e+30, %v436
          %v519 = vsel %vm503, -1e+30, %v439
          %v520 = vsel %vm504, -1e+30, %v441
          %v521 = vsel %vm505, -1e+30, %v444
          %v522 = vsel %vm506, -1e+30, %v446
          %v523 = vadd.f32 %v507, 0.2
          %v524 = vadd.f32 %v508, 0.2
          %v525 = vadd.f32 %v509, 0.2
          %v526 = vadd.f32 %v510, 0.2
          %v527 = vadd.f32 %v511, 0.2
          %v528 = vadd.f32 %v512, 0.2
          %v529 = vadd.f32 %v513, 0.2
          %v530 = vadd.f32 %v514, 0.2
          %v531 = vadd.f32 %v515, 0.2
          %v532 = vadd.f32 %v516, 0.2
          %v533 = vadd.f32 %v517, 0.2
          %v534 = vadd.f32 %v518, 0.2
          %v535 = vadd.f32 %v519, 0.2
          %v536 = vadd.f32 %v520, 0.2
          %v537 = vadd.f32 %v521, 0.2
          %v538 = vadd.f32 %v522, 0.2
          %540 = vset.pattern.permute.xlu0 0
          %541 = vperm.xlu0 %540, %v448
          %v542 = vpop.permute.xlu0 %541
          %545 = vset.pattern.permute.xlu0 0
          %546 = vperm.xlu0 %545, %v449
          %v547 = vpop.permute.xlu0 %546
          %550 = vset.pattern.permute.xlu0 0
          %551 = vperm.xlu0 %550, %v450
          %v552 = vpop.permute.xlu0 %551
          %555 = vset.pattern.permute.xlu0 0
          %556 = vperm.xlu0 %555, %v451
          %v557 = vpop.permute.xlu0 %556
          %560 = vset.pattern.permute.xlu0 0
          %561 = vperm.xlu0 %560, %v452
          %v562 = vpop.permute.xlu0 %561
          %565 = vset.pattern.permute.xlu0 0
          %566 = vperm.xlu0 %565, %v453
          %v567 = vpop.permute.xlu0 %566
          %570 = vset.pattern.permute.xlu0 0
          %571 = vperm.xlu0 %570, %v454
          %v572 = vpop.permute.xlu0 %571
          %575 = vset.pattern.permute.xlu0 0
          %576 = vperm.xlu0 %575, %v455
          %v577 = vpop.permute.xlu0 %576
          %580 = vset.pattern.permute.xlu0 0
          %581 = vperm.xlu0 %580, %v456
          %v582 = vpop.permute.xlu0 %581
          %585 = vset.pattern.permute.xlu0 0
          %586 = vperm.xlu0 %585, %v457
          %v587 = vpop.permute.xlu0 %586
          %590 = vset.pattern.permute.xlu0 0
          %591 = vperm.xlu0 %590, %v458
          %v592 = vpop.permute.xlu0 %591
          %595 = vset.pattern.permute.xlu0 0
          %596 = vperm.xlu0 %595, %v459
          %v597 = vpop.permute.xlu0 %596
          %600 = vset.pattern.permute.xlu0 0
          %601 = vperm.xlu0 %600, %v460
          %v602 = vpop.permute.xlu0 %601
          %605 = vset.pattern.permute.xlu0 0
          %606 = vperm.xlu0 %605, %v461
          %v607 = vpop.permute.xlu0 %606
          %610 = vset.pattern.permute.xlu0 0
          %611 = vperm.xlu0 %610, %v462
          %v612 = vpop.permute.xlu0 %611
          %615 = vset.pattern.permute.xlu0 0
          %616 = vperm.xlu0 %615, %v463
          %v617 = vpop.permute.xlu0 %616
          %v619 = vsub.f32 %v523, %v542
          %v620 = vsub.f32 %v524, %v547
          %v621 = vsub.f32 %v525, %v552
          %v622 = vsub.f32 %v526, %v557
          %v623 = vsub.f32 %v527, %v562
          %v624 = vsub.f32 %v528, %v567
          %v625 = vsub.f32 %v529, %v572
          %v626 = vsub.f32 %v530, %v577
          %v627 = vsub.f32 %v531, %v582
          %v628 = vsub.f32 %v532, %v587
          %v629 = vsub.f32 %v533, %v592
          %v630 = vsub.f32 %v534, %v597
          %v631 = vsub.f32 %v535, %v602
          %v632 = vsub.f32 %v536, %v607
          %v633 = vsub.f32 %v537, %v612
          %v634 = vsub.f32 %v538, %v617
          %v635 = vmax.f32 %v619, 0.0
          %v636 = vmax.f32 %v620, 0.0
          %v637 = vmax.f32 %v621, 0.0
          %v638 = vmax.f32 %v622, 0.0
          %v639 = vmax.f32 %v623, 0.0
          %v640 = vmax.f32 %v624, 0.0
          %v641 = vmax.f32 %v625, 0.0
          %v642 = vmax.f32 %v626, 0.0
          %v643 = vmax.f32 %v627, 0.0
          %v644 = vmax.f32 %v628, 0.0
          %v645 = vmax.f32 %v629, 0.0
          %v646 = vmax.f32 %v630, 0.0
          %v647 = vmax.f32 %v631, 0.0
          %v648 = vmax.f32 %v632, 0.0
          %v649 = vmax.f32 %v633, 0.0
          %v650 = vmax.f32 %v634, 0.0
          %v652 = vperm.slane %v467, 0
          %v654 = vsub.f32 %v523, %v652
          %v655 = vsub.f32 %v524, %v652
          %v656 = vsub.f32 %v525, %v652
          %v657 = vsub.f32 %v526, %v652
          %v658 = vsub.f32 %v527, %v652
          %v659 = vsub.f32 %v528, %v652
          %v660 = vsub.f32 %v529, %v652
          %v661 = vsub.f32 %v530, %v652
          %v662 = vsub.f32 %v531, %v652
          %v663 = vsub.f32 %v532, %v652
          %v664 = vsub.f32 %v533, %v652
          %v665 = vsub.f32 %v534, %v652
          %v666 = vsub.f32 %v535, %v652
          %v667 = vsub.f32 %v536, %v652
          %v668 = vsub.f32 %v537, %v652
          %v669 = vsub.f32 %v538, %v652
          %v670 = vmax.f32 %v654, 0.0
          %v671 = vmax.f32 %v655, 0.0
          %v672 = vmax.f32 %v656, 0.0
          %v673 = vmax.f32 %v657, 0.0
          %v674 = vmax.f32 %v658, 0.0
          %v675 = vmax.f32 %v659, 0.0
          %v676 = vmax.f32 %v660, 0.0
          %v677 = vmax.f32 %v661, 0.0
          %v678 = vmax.f32 %v662, 0.0
          %v679 = vmax.f32 %v663, 0.0
          %v680 = vmax.f32 %v664, 0.0
          %v681 = vmax.f32 %v665, 0.0
          %v682 = vmax.f32 %v666, 0.0
          %v683 = vmax.f32 %v667, 0.0
          %v684 = vmax.f32 %v668, 0.0
          %v685 = vmax.f32 %v669, 0.0
          %v686 = vadd.f32 %v635, %v670
          %v687 = vadd.f32 %v636, %v671
          %v688 = vadd.f32 %v637, %v672
          %v689 = vadd.f32 %v638, %v673
          %v690 = vadd.f32 %v639, %v674
          %v691 = vadd.f32 %v640, %v675
          %v692 = vadd.f32 %v641, %v676
          %v693 = vadd.f32 %v642, %v677
          %v694 = vadd.f32 %v643, %v678
          %v695 = vadd.f32 %v644, %v679
          %v696 = vadd.f32 %v645, %v680
          %v697 = vadd.f32 %v646, %v681
          %v698 = vadd.f32 %v647, %v682
          %v699 = vadd.f32 %v648, %v683
          %v700 = vadd.f32 %v649, %v684
          %v701 = vadd.f32 %v650, %v685
          %v702 = vadd.f32 %v686, %v687
          %v703 = vadd.f32 %v702, %v688
          %v704 = vadd.f32 %v703, %v689
          %v705 = vadd.f32 %v704, %v690
          %v706 = vadd.f32 %v705, %v691
          %v707 = vadd.f32 %v706, %v692
          %v708 = vadd.f32 %v707, %v693
          %v709 = vadd.f32 %v708, %v694
          %v710 = vadd.f32 %v709, %v695
          %v711 = vadd.f32 %v710, %v696
          %v712 = vadd.f32 %v711, %v697
          %v713 = vadd.f32 %v712, %v698
          %v714 = vadd.f32 %v713, %v699
          %v715 = vadd.f32 %v714, %v700
          %v716 = vadd.f32 %v715, %v701
          %v717 = vrot.slane %v716, 4
          %v718 = vadd.f32 %v716, %v717
          %v719 = vrot.slane %v718, 2
          %v720 = vadd.f32 %v718, %v719
          %v721 = vrot.slane %v720, 1
          %v722 = vadd.f32 %v720, %v721
          %723 = vst [vmem:[%s220] sm:$0x1] %v722
        $region40: #{tpu_custom_call.1} parent=35 // pred_fallthru
          _
        %p724 = scmp.ne.s32.totalorder %s22, %s23
        // Predicated region
        $region41: #{tpu_custom_call.1} parent=35 // pred_check
          %p725 = pneg %p724
        $region42: #{tpu_custom_call.1} parent=35 // pred_check_branch
          %727 = sbr.rel (%p725) target = $region44
        $region43: #{tpu_custom_call.1} parent=35 // pred_region
          %v728 = vadd.f32 %v409, 0.2
          %v729 = vadd.f32 %v411, 0.2
          %v730 = vadd.f32 %v414, 0.2
          %v731 = vadd.f32 %v416, 0.2
          %v732 = vadd.f32 %v419, 0.2
          %v733 = vadd.f32 %v421, 0.2
          %v734 = vadd.f32 %v424, 0.2
          %v735 = vadd.f32 %v426, 0.2
          %v736 = vadd.f32 %v429, 0.2
          %v737 = vadd.f32 %v431, 0.2
          %v738 = vadd.f32 %v434, 0.2
          %v739 = vadd.f32 %v436, 0.2
          %v740 = vadd.f32 %v439, 0.2
          %v741 = vadd.f32 %v441, 0.2
          %v742 = vadd.f32 %v444, 0.2
          %v743 = vadd.f32 %v446, 0.2
          %745 = vset.pattern.permute.xlu0 0
          %746 = vperm.xlu0 %745, %v448
          %v747 = vpop.permute.xlu0 %746
          %750 = vset.pattern.permute.xlu0 0
          %751 = vperm.xlu0 %750, %v449
          %v752 = vpop.permute.xlu0 %751
          %755 = vset.pattern.permute.xlu0 0
          %756 = vperm.xlu0 %755, %v450
          %v757 = vpop.permute.xlu0 %756
          %760 = vset.pattern.permute.xlu0 0
          %761 = vperm.xlu0 %760, %v451
          %v762 = vpop.permute.xlu0 %761
          %765 = vset.pattern.permute.xlu0 0
          %766 = vperm.xlu0 %765, %v452
          %v767 = vpop.permute.xlu0 %766
          %770 = vset.pattern.permute.xlu0 0
          %771 = vperm.xlu0 %770, %v453
          %v772 = vpop.permute.xlu0 %771
          %775 = vset.pattern.permute.xlu0 0
          %776 = vperm.xlu0 %775, %v454
          %v777 = vpop.permute.xlu0 %776
          %780 = vset.pattern.permute.xlu0 0
          %781 = vperm.xlu0 %780, %v455
          %v782 = vpop.permute.xlu0 %781
          %785 = vset.pattern.permute.xlu0 0
          %786 = vperm.xlu0 %785, %v456
          %v787 = vpop.permute.xlu0 %786
          %790 = vset.pattern.permute.xlu0 0
          %791 = vperm.xlu0 %790, %v457
          %v792 = vpop.permute.xlu0 %791
          %795 = vset.pattern.permute.xlu0 0
          %796 = vperm.xlu0 %795, %v458
          %v797 = vpop.permute.xlu0 %796
          %800 = vset.pattern.permute.xlu0 0
          %801 = vperm.xlu0 %800, %v459
          %v802 = vpop.permute.xlu0 %801
          %805 = vset.pattern.permute.xlu0 0
          %806 = vperm.xlu0 %805, %v460
          %v807 = vpop.permute.xlu0 %806
          %810 = vset.pattern.permute.xlu0 0
          %811 = vperm.xlu0 %810, %v461
          %v812 = vpop.permute.xlu0 %811
          %815 = vset.pattern.permute.xlu0 0
          %816 = vperm.xlu0 %815, %v462
          %v817 = vpop.permute.xlu0 %816
          %820 = vset.pattern.permute.xlu0 0
          %821 = vperm.xlu0 %820, %v463
          %v822 = vpop.permute.xlu0 %821
          %v824 = vsub.f32 %v728, %v747
          %v825 = vsub.f32 %v729, %v752
          %v826 = vsub.f32 %v730, %v757
          %v827 = vsub.f32 %v731, %v762
          %v828 = vsub.f32 %v732, %v767
          %v829 = vsub.f32 %v733, %v772
          %v830 = vsub.f32 %v734, %v777
          %v831 = vsub.f32 %v735, %v782
          %v832 = vsub.f32 %v736, %v787
          %v833 = vsub.f32 %v737, %v792
          %v834 = vsub.f32 %v738, %v797
          %v835 = vsub.f32 %v739, %v802
          %v836 = vsub.f32 %v740, %v807
          %v837 = vsub.f32 %v741, %v812
          %v838 = vsub.f32 %v742, %v817
          %v839 = vsub.f32 %v743, %v822
          %v840 = vmax.f32 %v824, 0.0
          %v841 = vmax.f32 %v825, 0.0
          %v842 = vmax.f32 %v826, 0.0
          %v843 = vmax.f32 %v827, 0.0
          %v844 = vmax.f32 %v828, 0.0
          %v845 = vmax.f32 %v829, 0.0
          %v846 = vmax.f32 %v830, 0.0
          %v847 = vmax.f32 %v831, 0.0
          %v848 = vmax.f32 %v832, 0.0
          %v849 = vmax.f32 %v833, 0.0
          %v850 = vmax.f32 %v834, 0.0
          %v851 = vmax.f32 %v835, 0.0
          %v852 = vmax.f32 %v836, 0.0
          %v853 = vmax.f32 %v837, 0.0
          %v854 = vmax.f32 %v838, 0.0
          %v855 = vmax.f32 %v839, 0.0
          %v857 = vperm.slane %v467, 0
          %v859 = vsub.f32 %v728, %v857
          %v860 = vsub.f32 %v729, %v857
          %v861 = vsub.f32 %v730, %v857
          %v862 = vsub.f32 %v731, %v857
          %v863 = vsub.f32 %v732, %v857
          %v864 = vsub.f32 %v733, %v857
          %v865 = vsub.f32 %v734, %v857
          %v866 = vsub.f32 %v735, %v857
          %v867 = vsub.f32 %v736, %v857
          %v868 = vsub.f32 %v737, %v857
          %v869 = vsub.f32 %v738, %v857
          %v870 = vsub.f32 %v739, %v857
          %v871 = vsub.f32 %v740, %v857
          %v872 = vsub.f32 %v741, %v857
          %v873 = vsub.f32 %v742, %v857
          %v874 = vsub.f32 %v743, %v857
          %v875 = vmax.f32 %v859, 0.0
          %v876 = vmax.f32 %v860, 0.0
          %v877 = vmax.f32 %v861, 0.0
          %v878 = vmax.f32 %v862, 0.0
          %v879 = vmax.f32 %v863, 0.0
          %v880 = vmax.f32 %v864, 0.0
          %v881 = vmax.f32 %v865, 0.0
          %v882 = vmax.f32 %v866, 0.0
          %v883 = vmax.f32 %v867, 0.0
          %v884 = vmax.f32 %v868, 0.0
          %v885 = vmax.f32 %v869, 0.0
          %v886 = vmax.f32 %v870, 0.0
          %v887 = vmax.f32 %v871, 0.0
          %v888 = vmax.f32 %v872, 0.0
          %v889 = vmax.f32 %v873, 0.0
          %v890 = vmax.f32 %v874, 0.0
          %v891 = vadd.f32 %v840, %v875
          %v892 = vadd.f32 %v841, %v876
          %v893 = vadd.f32 %v842, %v877
          %v894 = vadd.f32 %v843, %v878
          %v895 = vadd.f32 %v844, %v879
          %v896 = vadd.f32 %v845, %v880
          %v897 = vadd.f32 %v846, %v881
          %v898 = vadd.f32 %v847, %v882
          %v899 = vadd.f32 %v848, %v883
          %v900 = vadd.f32 %v849, %v884
          %v901 = vadd.f32 %v850, %v885
          %v902 = vadd.f32 %v851, %v886
          %v903 = vadd.f32 %v852, %v887
          %v904 = vadd.f32 %v853, %v888
          %v905 = vadd.f32 %v854, %v889
          %v906 = vadd.f32 %v855, %v890
          %v907 = vadd.f32 %v891, %v892
          %v908 = vadd.f32 %v907, %v893
          %v909 = vadd.f32 %v908, %v894
          %v910 = vadd.f32 %v909, %v895
          %v911 = vadd.f32 %v910, %v896
          %v912 = vadd.f32 %v911, %v897
          %v913 = vadd.f32 %v912, %v898
          %v914 = vadd.f32 %v913, %v899
          %v915 = vadd.f32 %v914, %v900
          %v916 = vadd.f32 %v915, %v901
          %v917 = vadd.f32 %v916, %v902
          %v918 = vadd.f32 %v917, %v903
          %v919 = vadd.f32 %v918, %v904
          %v920 = vadd.f32 %v919, %v905
          %v921 = vadd.f32 %v920, %v906
          %v922 = vrot.slane %v921, 4
          %v923 = vadd.f32 %v921, %v922
          %v924 = vrot.slane %v923, 2
          %v925 = vadd.f32 %v923, %v924
          %v926 = vrot.slane %v925, 1
          %v927 = vadd.f32 %v925, %v926
          %928 = vst [vmem:[%s220] sm:$0x1] %v927
        $region44: #{tpu_custom_call.1} parent=35 // pred_fallthru
          _
        %s929 = sand.u32 %s134, 1
        %s930 = scalar_lea.sflag [#allocation3], %s929
        %s931 = sand.u32 %s134, 1
        %s932 = scalar_lea.vmem [#allocation2], %s931
        // Predicated region
        $region45: #{tpu_custom_call.1} parent=35 // pred_check
          %p933 = pneg %p144
        $region46: #{tpu_custom_call.1} parent=35 // pred_check_branch
          %935 = sbr.rel (%p933) target = $region48
        $region47: #{tpu_custom_call.1} parent=35 // pred_region
          %937 = vsyncadd %s930, 0
          %s938 = smul.addr %s22, 2
          %s939 = sadd.s32 %s23, %s938
          %s940 = scalar_lea.hbm %s4, %s939
          %s942 = sshll.u32 %s932, 4
          %s943 = int_to_ptr.vmem [resolvable:$true] %s942
          %s944 = sshll.u32 %s940, 4
          %s945 = int_to_ptr.hbm [resolvable:$true] %s944
          %947 = dma.vmem_to_hbm [thread:$0]  %s943, 16, %s945, %s930
        $region48: #{tpu_custom_call.1} parent=35 // pred_fallthru
          _
      $region36: #{tpu_custom_call.1} parent=5 // pred_fallthru
        _
      %p948 = scmp.le.s32.totalorder 2, %s13
      // Predicated region
      $region49: #{tpu_custom_call.1} parent=5 // pred_check
        %p949 = pneg %p948
      $region50: #{tpu_custom_call.1} parent=5 // pred_check_branch
        %951 = sbr.rel (%p949) target = $region52
      $region51: #{tpu_custom_call.1} parent=5 // pred_region
        %s952 = ssub.s32 %s13, 2
        // Predicated region
        $region53: #{tpu_custom_call.1} parent=51 // pred_check
          %p953 = pneg %p150
        $region54: #{tpu_custom_call.1} parent=51 // pred_check_branch
          %955 = sbr.rel (%p953) target = $region56
        $region55: #{tpu_custom_call.1} parent=51 // pred_region
          %s956 = sand.u32 %s135, 1
          %s957 = scalar_lea.sflag [#allocation3], %s956
          %s958 = sand.u32 %s135, 1
          %s959 = scalar_lea.vmem [#allocation2], %s958
          %961 = dma.done %s957, 16
        $region56: #{tpu_custom_call.1} parent=51 // pred_fallthru
          _
      $region52: #{tpu_custom_call.1} parent=5 // pred_fallthru
        _
    $region6: #{tpu_custom_call.1} parent=1 // loop_footer
      %s17 = sadd.s32 1, %s13
    $region7: #{tpu_custom_call.1} parent=1 // loop_footer_branch
      %12 = sbr.rel target = $region3
    $region8: #{tpu_custom_call.1} parent=1 // loop_exit
      _
    %962 = vsyncpa [#allocation3], 1
    %s963 = scalar_lea.sflag [#allocation3], 1
    %964 = vsyncpa %s963, 1

</llo_original>
